<compile_context>
chip_gen: v5e
topology: v5e:2x2
jax: 0.10.0
libtpu: 0.0.40
codegen_flags: <defaults>
</compile_context>

<pallas_src>
import functools

import numpy as np
import jax
import jax.numpy as jnp
from jax.experimental import pallas as pl
from jax.experimental.pallas import tpu as pltpu

MIN_VALUE = 0.0
MAX_VALUE = 6.4
K = 5          # kernel size
STRIDE = 2
PAD = 1
C_IN = 3
C_OUT = 32
C_PAD = 8      # channels padded to one sublane tile per tap (rows 3..7 spare)

# clamp-before-pool + zero-halo pooling is only valid because MIN_VALUE == 0.
assert MIN_VALUE == 0.0


def _round_up(a, m):
    return (a + m - 1) // m * m


def _fused_kernel(x_ref, w_ref, mask_ref, o_ref, patch_ref, *, taps, lq, row_stride):
    """In-kernel im2col + conv-transpose matmul + clamp + 3x3 max-pool.

    x_ref     : (1, 8, LIN)   flattened relu'd/dilated/padded input, row stride
                              `row_stride`; row 3 = ones (bias), rows 4..7 = 0.
    w_ref     : (C_OUT, 200)  flipped deconv weight, bias in tap-0 / chan-3 col.
    mask_ref  : (1, LQ)       1.0 at valid flat output pixels, 0.0 at junk cols.
    o_ref     : (1, C_OUT, LQ)
    patch_ref : (200, LQ)     VMEM scratch for the im2col patch matrix.
    """
    xfull = x_ref[0]                                            # (8, LIN)

    # Build the patch matrix: one sublane-aligned 8-row group per (kh, kw) tap,
    # each group a static lane-shifted window of the flattened input.
    for t, s in enumerate(taps):
        patch_ref[C_PAD * t:C_PAD * (t + 1), :] = xfull[:, s:s + lq]

    # ConvTranspose2d + bias as ONE (32, 200) @ (200, LQ) MXU matmul.
    z = jnp.dot(w_ref[...], patch_ref[...], preferred_element_type=jnp.float32)

    # Clamp BEFORE pooling (valid since MIN_VALUE == 0), then zero the junk
    # columns so circular rolls never leak real values across row boundaries.
    z = jnp.clip(z, MIN_VALUE, MAX_VALUE) * mask_ref[...]       # (32, LQ)

    # Separable 3x3 max-pool with circular lane rolls (XLU slot). Wrap-around
    # only reads / lands on zeroed junk columns, so no boundary masks needed.
    m1 = jnp.maximum(z, jnp.maximum(pltpu.roll(z, shift=1, axis=1),
                                    pltpu.roll(z, shift=lq - 1, axis=1)))
    out = jnp.maximum(m1, jnp.maximum(pltpu.roll(m1, shift=row_stride, axis=1),
                                      pltpu.roll(m1, shift=lq - row_stride, axis=1)))

    o_ref[0] = out.astype(o_ref.dtype)


@jax.jit
def model_forward(x, w, b):
    """x: (N, C_IN, H, W) f32 NCHW; w: (C_IN, C_OUT, K, K); b: (C_OUT,).

    Returns (N, C_OUT, OH, OW) NCHW, matching the PyTorch module.
    """
    N, C, H, W = x.shape
    OH = (H - 1) * STRIDE - 2 * PAD + K
    OW = (W - 1) * STRIDE - 2 * PAD + K
    p = K - 1 - PAD                                     # = 3
    HP = (H - 1) * STRIDE + 1 + 2 * p                   # dilated + padded height
    WP = (W - 1) * STRIDE + 1 + 2 * p                   # dilated + padded width
    P = WP                                              # common flat row stride
    assert OW < P                                       # junk gap between rows
    LQ = _round_up((OH + 1) * P + 1, 128)               # padded flat output len
    max_shift = (K - 1) * P + (K - 1)
    LIN = _round_up(max(HP * P, max_shift + LQ), 128)   # padded flat input len

    # ---- tiny wrapper-side glue (one small XLA fusion on a few KB) ----
    xr = jnp.maximum(x, 0.0)                            # relu BEFORE expansion
    xpad = jax.lax.pad(
        xr, jnp.float32(0.0),
        ((0, 0, 0), (0, 0, 0), (p, p, STRIDE - 1), (p, p, STRIDE - 1)))  # (N,C,HP,WP)
    xflat = xpad.reshape(N, C, HP * WP)
    xflat = jnp.pad(xflat, ((0, 0), (0, 0), (0, LIN - HP * WP)))         # (N,C,LIN)
    ones_row = jnp.ones((N, 1, LIN), jnp.float32)       # bias row
    zero_rows = jnp.zeros((N, C_PAD - C - 1, LIN), jnp.float32)
    x_in = jnp.concatenate([xflat, ones_row, zero_rows], axis=1)         # (N,8,LIN)

    # ConvTranspose weight -> flipped direct-conv weight, (OC, tap-major x 8 ch),
    # bias folded into the spare channel (c=3) of tap 0.
    w_flip = w[:, :, ::-1, ::-1]                                   # (C, OC, K, K)
    w_dir = jnp.transpose(w_flip, (1, 0, 2, 3))                    # (OC, C, K, K)
    w_tap = jnp.transpose(w_dir, (0, 2, 3, 1)).reshape(C_OUT, K * K, C)
    w_tap = jnp.pad(w_tap, ((0, 0), (0, 0), (0, C_PAD - C)))       # (OC, 25, 8)
    w_tap = w_tap.at[:, 0, C].set(b)
    w_mat = w_tap.reshape(C_OUT, K * K * C_PAD)                    # (OC, 200)

    # Validity mask over the padded flat pixel axis (compile-time constant).
    col = np.arange(LQ)
    mask = jnp.asarray(((col % P < OW) & (col < OH * P)).astype(np.float32))
    mask = mask.reshape(1, LQ)

    taps = tuple(kh * P + kw for kh in range(K) for kw in range(K))
    kernel = functools.partial(_fused_kernel, taps=taps, lq=LQ, row_stride=P)

    out_flat = pl.pallas_call(
        kernel,
        out_shape=jax.ShapeDtypeStruct((N, C_OUT, LQ), jnp.float32),
        grid_spec=pltpu.PrefetchScalarGridSpec(
            num_scalar_prefetch=0,
            grid=(N,),
            in_specs=[
                pl.BlockSpec((1, C_PAD, LIN), lambda n: (n, 0, 0)),
                pl.BlockSpec((C_OUT, K * K * C_PAD), lambda n: (0, 0)),
                pl.BlockSpec((1, LQ), lambda n: (0, 0)),
            ],
            out_specs=pl.BlockSpec((1, C_OUT, LQ), lambda n: (n, 0, 0)),
            scratch_shapes=[pltpu.VMEM((K * K * C_PAD, LQ), jnp.float32)],
        ),
        compiler_params=pltpu.CompilerParams(
            dimension_semantics=("parallel",)),
    )(x_in, w_mat, mask)

    # Strip the per-row junk columns: flat q = oy*P + ox  ->  (OH, OW).
    out = out_flat[:, :, :OH * P].reshape(N, C_OUT, OH, P)[:, :, :, :OW]
    return out


def reference(x, w, b):
    """Pure-JAX reference of the PyTorch forward pass (NCHW)."""
    xr = jnp.maximum(x, 0.0)
    w_oihw = jnp.transpose(w[:, :, ::-1, ::-1], (1, 0, 2, 3))
    y = jax.lax.conv_general_dilated(
        xr, w_oihw,
        window_strides=(1, 1),
        padding=[(K - 1 - PAD, K - 1 - PAD)] * 2,
        lhs_dilation=(STRIDE, STRIDE),
        dimension_numbers=('NCHW', 'OIHW', 'NCHW'))
    y = y + b.reshape(1, -1, 1, 1)
    z = jax.lax.reduce_window(
        y, jnp.float32(-jnp.inf), jax.lax.max,
        (1, 1, 3, 3), (1, 1, 1, 1),
        [(0, 0), (0, 0), (1, 1), (1, 1)])
    return jnp.clip(z, MIN_VALUE, MAX_VALUE)


if __name__ == "__main__":
    key = jax.random.PRNGKey(0)
    kx, kw, kb = jax.random.split(key, 3)

    N, H, W = 2, 8, 8                     # small NCHW input: (2, 3, 8, 8)
    x = jax.random.normal(kx, (N, C_IN, H, W), jnp.float32)

    # Deterministic parameter init (uniform +-1/sqrt(fan_in), PyTorch-style).
    fan_in = C_IN * K * K
    bound = 1.0 / (fan_in ** 0.5)
    w = jax.random.uniform(kw, (C_IN, C_OUT, K, K), jnp.float32, -bound, bound)
    b = jax.random.uniform(kb, (C_OUT,), jnp.float32, -bound, bound)

    out = jax.block_until_ready(model_forward(x, w, b))
    ref = reference(x, w, b)

    assert out.shape == ref.shape, (out.shape, ref.shape)
    max_err = float(jnp.max(jnp.abs(out - ref)))
    assert jnp.allclose(out, ref, atol=2e-4, rtol=2e-4), max_err
    print("KERNEL_OK")
</pallas_src>

<mosaic_0001>
module attributes {stable_mosaic.version = 11 : i64} {
  func.func @_fused_kernel(%arg0: i32, %arg1: memref<1x8x512xf32, #tpu.memory_space<vmem>>, %arg2: memref<32x200xf32, #tpu.memory_space<vmem>>, %arg3: memref<1x384xf32, #tpu.memory_space<vmem>>, %arg4: memref<1x32x384xf32, #tpu.memory_space<vmem>>, %arg5: memref<200x384xf32, #tpu.memory_space<vmem>>) attributes {dimension_semantics = [#tpu.dimension_semantics<parallel>], iteration_bounds = array<i64: 2>, scalar_prefetch = 0 : i64, scratch_operands = 1 : i64, tpu.core_type = #tpu.core_type<tc>, window_params = [{transform_indices = @transform_0, window_bounds = array<i64: 1, 8, 512>}, {pipeline_mode = #tpu.pipeline_mode<synchronous>, transform_indices = @transform_1, window_bounds = array<i64: 32, 200>}, {pipeline_mode = #tpu.pipeline_mode<synchronous>, transform_indices = @transform_2, window_bounds = array<i64: 1, 384>}, {transform_indices = @transform_3, window_bounds = array<i64: 1, 32, 384>}]} {
    %c0 = arith.constant 0 : index
    %c0_0 = arith.constant 0 : index
    %c0_1 = arith.constant 0 : index
    %0 = vector.load %arg1[%c0, %c0_0, %c0_1] : memref<1x8x512xf32, #tpu.memory_space<vmem>>, vector<1x8x512xf32>
    %1 = vector.shape_cast %0 : vector<1x8x512xf32> to vector<8x512xf32>
    %2 = vector.extract_strided_slice %1 {offsets = [0, 0], sizes = [8, 384], strides = [1, 1]} : vector<8x512xf32> to vector<8x384xf32>
    %c0_2 = arith.constant 0 : index
    %c0_3 = arith.constant 0 : index
    %3 = vector.load %arg5[%c0_2, %c0_3] : memref<200x384xf32, #tpu.memory_space<vmem>>, vector<8x384xf32>
    tpu.vector_store %arg5[%c0_2, %c0_3], %2 {strides = array<i32>} : memref<200x384xf32, #tpu.memory_space<vmem>>, vector<8x384xf32>,
    %4 = vector.extract_strided_slice %1 {offsets = [0, 1], sizes = [8, 384], strides = [1, 1]} : vector<8x512xf32> to vector<8x384xf32>
    %c8 = arith.constant 8 : index
    %c0_4 = arith.constant 0 : index
    %5 = vector.load %arg5[%c8, %c0_4] : memref<200x384xf32, #tpu.memory_space<vmem>>, vector<8x384xf32>
    tpu.vector_store %arg5[%c8, %c0_4], %4 {strides = array<i32>} : memref<200x384xf32, #tpu.memory_space<vmem>>, vector<8x384xf32>,
    %6 = vector.extract_strided_slice %1 {offsets = [0, 2], sizes = [8, 384], strides = [1, 1]} : vector<8x512xf32> to vector<8x384xf32>
    %c16 = arith.constant 16 : index
    %c0_5 = arith.constant 0 : index
    %7 = vector.load %arg5[%c16, %c0_5] : memref<200x384xf32, #tpu.memory_space<vmem>>, vector<8x384xf32>
    tpu.vector_store %arg5[%c16, %c0_5], %6 {strides = array<i32>} : memref<200x384xf32, #tpu.memory_space<vmem>>, vector<8x384xf32>,
    %8 = vector.extract_strided_slice %1 {offsets = [0, 3], sizes = [8, 384], strides = [1, 1]} : vector<8x512xf32> to vector<8x384xf32>
    %c24 = arith.constant 24 : index
    %c0_6 = arith.constant 0 : index
    %9 = vector.load %arg5[%c24, %c0_6] : memref<200x384xf32, #tpu.memory_space<vmem>>, vector<8x384xf32>
    tpu.vector_store %arg5[%c24, %c0_6], %8 {strides = array<i32>} : memref<200x384xf32, #tpu.memory_space<vmem>>, vector<8x384xf32>,
    %10 = vector.extract_strided_slice %1 {offsets = [0, 4], sizes = [8, 384], strides = [1, 1]} : vector<8x512xf32> to vector<8x384xf32>
    %c32 = arith.constant 32 : index
    %c0_7 = arith.constant 0 : index
    %11 = vector.load %arg5[%c32, %c0_7] : memref<200x384xf32, #tpu.memory_space<vmem>>, vector<8x384xf32>
    tpu.vector_store %arg5[%c32, %c0_7], %10 {strides = array<i32>} : memref<200x384xf32, #tpu.memory_space<vmem>>, vector<8x384xf32>,
    %12 = vector.extract_strided_slice %1 {offsets = [0, 21], sizes = [8, 384], strides = [1, 1]} : vector<8x512xf32> to vector<8x384xf32>
    %c40 = arith.constant 40 : index
    %c0_8 = arith.constant 0 : index
    %13 = vector.load %arg5[%c40, %c0_8] : memref<200x384xf32, #tpu.memory_space<vmem>>, vector<8x384xf32>
    tpu.vector_store %arg5[%c40, %c0_8], %12 {strides = array<i32>} : memref<200x384xf32, #tpu.memory_space<vmem>>, vector<8x384xf32>,
    %14 = vector.extract_strided_slice %1 {offsets = [0, 22], sizes = [8, 384], strides = [1, 1]} : vector<8x512xf32> to vector<8x384xf32>
    %c48 = arith.constant 48 : index
    %c0_9 = arith.constant 0 : index
    %15 = vector.load %arg5[%c48, %c0_9] : memref<200x384xf32, #tpu.memory_space<vmem>>, vector<8x384xf32>
    tpu.vector_store %arg5[%c48, %c0_9], %14 {strides = array<i32>} : memref<200x384xf32, #tpu.memory_space<vmem>>, vector<8x384xf32>,
    %16 = vector.extract_strided_slice %1 {offsets = [0, 23], sizes = [8, 384], strides = [1, 1]} : vector<8x512xf32> to vector<8x384xf32>
    %c56 = arith.constant 56 : index
    %c0_10 = arith.constant 0 : index
    %17 = vector.load %arg5[%c56, %c0_10] : memref<200x384xf32, #tpu.memory_space<vmem>>, vector<8x384xf32>
    tpu.vector_store %arg5[%c56, %c0_10], %16 {strides = array<i32>} : memref<200x384xf32, #tpu.memory_space<vmem>>, vector<8x384xf32>,
    %18 = vector.extract_strided_slice %1 {offsets = [0, 24], sizes = [8, 384], strides = [1, 1]} : vector<8x512xf32> to vector<8x384xf32>
    %c64 = arith.constant 64 : index
    %c0_11 = arith.constant 0 : index
    %19 = vector.load %arg5[%c64, %c0_11] : memref<200x384xf32, #tpu.memory_space<vmem>>, vector<8x384xf32>
    tpu.vector_store %arg5[%c64, %c0_11], %18 {strides = array<i32>} : memref<200x384xf32, #tpu.memory_space<vmem>>, vector<8x384xf32>,
    %20 = vector.extract_strided_slice %1 {offsets = [0, 25], sizes = [8, 384], strides = [1, 1]} : vector<8x512xf32> to vector<8x384xf32>
    %c72 = arith.constant 72 : index
    %c0_12 = arith.constant 0 : index
    %21 = vector.load %arg5[%c72, %c0_12] : memref<200x384xf32, #tpu.memory_space<vmem>>, vector<8x384xf32>
    tpu.vector_store %arg5[%c72, %c0_12], %20 {strides = array<i32>} : memref<200x384xf32, #tpu.memory_space<vmem>>, vector<8x384xf32>,
    %22 = vector.extract_strided_slice %1 {offsets = [0, 42], sizes = [8, 384], strides = [1, 1]} : vector<8x512xf32> to vector<8x384xf32>
    %c80 = arith.constant 80 : index
    %c0_13 = arith.constant 0 : index
    %23 = vector.load %arg5[%c80, %c0_13] : memref<200x384xf32, #tpu.memory_space<vmem>>, vector<8x384xf32>
    tpu.vector_store %arg5[%c80, %c0_13], %22 {strides = array<i32>} : memref<200x384xf32, #tpu.memory_space<vmem>>, vector<8x384xf32>,
    %24 = vector.extract_strided_slice %1 {offsets = [0, 43], sizes = [8, 384], strides = [1, 1]} : vector<8x512xf32> to vector<8x384xf32>
    %c88 = arith.constant 88 : index
    %c0_14 = arith.constant 0 : index
    %25 = vector.load %arg5[%c88, %c0_14] : memref<200x384xf32, #tpu.memory_space<vmem>>, vector<8x384xf32>
    tpu.vector_store %arg5[%c88, %c0_14], %24 {strides = array<i32>} : memref<200x384xf32, #tpu.memory_space<vmem>>, vector<8x384xf32>,
    %26 = vector.extract_strided_slice %1 {offsets = [0, 44], sizes = [8, 384], strides = [1, 1]} : vector<8x512xf32> to vector<8x384xf32>
    %c96 = arith.constant 96 : index
    %c0_15 = arith.constant 0 : index
    %27 = vector.load %arg5[%c96, %c0_15] : memref<200x384xf32, #tpu.memory_space<vmem>>, vector<8x384xf32>
    tpu.vector_store %arg5[%c96, %c0_15], %26 {strides = array<i32>} : memref<200x384xf32, #tpu.memory_space<vmem>>, vector<8x384xf32>,
    %28 = vector.extract_strided_slice %1 {offsets = [0, 45], sizes = [8, 384], strides = [1, 1]} : vector<8x512xf32> to vector<8x384xf32>
    %c104 = arith.constant 104 : index
    %c0_16 = arith.constant 0 : index
    %29 = vector.load %arg5[%c104, %c0_16] : memref<200x384xf32, #tpu.memory_space<vmem>>, vector<8x384xf32>
    tpu.vector_store %arg5[%c104, %c0_16], %28 {strides = array<i32>} : memref<200x384xf32, #tpu.memory_space<vmem>>, vector<8x384xf32>,
    %30 = vector.extract_strided_slice %1 {offsets = [0, 46], sizes = [8, 384], strides = [1, 1]} : vector<8x512xf32> to vector<8x384xf32>
    %c112 = arith.constant 112 : index
    %c0_17 = arith.constant 0 : index
    %31 = vector.load %arg5[%c112, %c0_17] : memref<200x384xf32, #tpu.memory_space<vmem>>, vector<8x384xf32>
    tpu.vector_store %arg5[%c112, %c0_17], %30 {strides = array<i32>} : memref<200x384xf32, #tpu.memory_space<vmem>>, vector<8x384xf32>,
    %32 = vector.extract_strided_slice %1 {offsets = [0, 63], sizes = [8, 384], strides = [1, 1]} : vector<8x512xf32> to vector<8x384xf32>
    %c120 = arith.constant 120 : index
    %c0_18 = arith.constant 0 : index
    %33 = vector.load %arg5[%c120, %c0_18] : memref<200x384xf32, #tpu.memory_space<vmem>>, vector<8x384xf32>
    tpu.vector_store %arg5[%c120, %c0_18], %32 {strides = array<i32>} : memref<200x384xf32, #tpu.memory_space<vmem>>, vector<8x384xf32>,
    %34 = vector.extract_strided_slice %1 {offsets = [0, 64], sizes = [8, 384], strides = [1, 1]} : vector<8x512xf32> to vector<8x384xf32>
    %c128 = arith.constant 128 : index
    %c0_19 = arith.constant 0 : index
    %35 = vector.load %arg5[%c128, %c0_19] : memref<200x384xf32, #tpu.memory_space<vmem>>, vector<8x384xf32>
    tpu.vector_store %arg5[%c128, %c0_19], %34 {strides = array<i32>} : memref<200x384xf32, #tpu.memory_space<vmem>>, vector<8x384xf32>,
    %36 = vector.extract_strided_slice %1 {offsets = [0, 65], sizes = [8, 384], strides = [1, 1]} : vector<8x512xf32> to vector<8x384xf32>
    %c136 = arith.constant 136 : index
    %c0_20 = arith.constant 0 : index
    %37 = vector.load %arg5[%c136, %c0_20] : memref<200x384xf32, #tpu.memory_space<vmem>>, vector<8x384xf32>
    tpu.vector_store %arg5[%c136, %c0_20], %36 {strides = array<i32>} : memref<200x384xf32, #tpu.memory_space<vmem>>, vector<8x384xf32>,
    %38 = vector.extract_strided_slice %1 {offsets = [0, 66], sizes = [8, 384], strides = [1, 1]} : vector<8x512xf32> to vector<8x384xf32>
    %c144 = arith.constant 144 : index
    %c0_21 = arith.constant 0 : index
    %39 = vector.load %arg5[%c144, %c0_21] : memref<200x384xf32, #tpu.memory_space<vmem>>, vector<8x384xf32>
    tpu.vector_store %arg5[%c144, %c0_21], %38 {strides = array<i32>} : memref<200x384xf32, #tpu.memory_space<vmem>>, vector<8x384xf32>,
    %40 = vector.extract_strided_slice %1 {offsets = [0, 67], sizes = [8, 384], strides = [1, 1]} : vector<8x512xf32> to vector<8x384xf32>
    %c152 = arith.constant 152 : index
    %c0_22 = arith.constant 0 : index
    %41 = vector.load %arg5[%c152, %c0_22] : memref<200x384xf32, #tpu.memory_space<vmem>>, vector<8x384xf32>
    tpu.vector_store %arg5[%c152, %c0_22], %40 {strides = array<i32>} : memref<200x384xf32, #tpu.memory_space<vmem>>, vector<8x384xf32>,
    %42 = vector.extract_strided_slice %1 {offsets = [0, 84], sizes = [8, 384], strides = [1, 1]} : vector<8x512xf32> to vector<8x384xf32>
    %c160 = arith.constant 160 : index
    %c0_23 = arith.constant 0 : index
    %43 = vector.load %arg5[%c160, %c0_23] : memref<200x384xf32, #tpu.memory_space<vmem>>, vector<8x384xf32>
    tpu.vector_store %arg5[%c160, %c0_23], %42 {strides = array<i32>} : memref<200x384xf32, #tpu.memory_space<vmem>>, vector<8x384xf32>,
    %44 = vector.extract_strided_slice %1 {offsets = [0, 85], sizes = [8, 384], strides = [1, 1]} : vector<8x512xf32> to vector<8x384xf32>
    %c168 = arith.constant 168 : index
    %c0_24 = arith.constant 0 : index
    %45 = vector.load %arg5[%c168, %c0_24] : memref<200x384xf32, #tpu.memory_space<vmem>>, vector<8x384xf32>
    tpu.vector_store %arg5[%c168, %c0_24], %44 {strides = array<i32>} : memref<200x384xf32, #tpu.memory_space<vmem>>, vector<8x384xf32>,
    %46 = vector.extract_strided_slice %1 {offsets = [0, 86], sizes = [8, 384], strides = [1, 1]} : vector<8x512xf32> to vector<8x384xf32>
    %c176 = arith.constant 176 : index
    %c0_25 = arith.constant 0 : index
    %47 = vector.load %arg5[%c176, %c0_25] : memref<200x384xf32, #tpu.memory_space<vmem>>, vector<8x384xf32>
    tpu.vector_store %arg5[%c176, %c0_25], %46 {strides = array<i32>} : memref<200x384xf32, #tpu.memory_space<vmem>>, vector<8x384xf32>,
    %48 = vector.extract_strided_slice %1 {offsets = [0, 87], sizes = [8, 384], strides = [1, 1]} : vector<8x512xf32> to vector<8x384xf32>
    %c184 = arith.constant 184 : index
    %c0_26 = arith.constant 0 : index
    %49 = vector.load %arg5[%c184, %c0_26] : memref<200x384xf32, #tpu.memory_space<vmem>>, vector<8x384xf32>
    tpu.vector_store %arg5[%c184, %c0_26], %48 {strides = array<i32>} : memref<200x384xf32, #tpu.memory_space<vmem>>, vector<8x384xf32>,
    %50 = vector.extract_strided_slice %1 {offsets = [0, 88], sizes = [8, 384], strides = [1, 1]} : vector<8x512xf32> to vector<8x384xf32>
    %c192 = arith.constant 192 : index
    %c0_27 = arith.constant 0 : index
    %51 = vector.load %arg5[%c192, %c0_27] : memref<200x384xf32, #tpu.memory_space<vmem>>, vector<8x384xf32>
    tpu.vector_store %arg5[%c192, %c0_27], %50 {strides = array<i32>} : memref<200x384xf32, #tpu.memory_space<vmem>>, vector<8x384xf32>,
    %c0_28 = arith.constant 0 : index
    %c0_29 = arith.constant 0 : index
    %52 = vector.load %arg2[%c0_28, %c0_29] : memref<32x200xf32, #tpu.memory_space<vmem>>, vector<32x200xf32>
    %c0_30 = arith.constant 0 : index
    %c0_31 = arith.constant 0 : index
    %53 = vector.load %arg5[%c0_30, %c0_31] : memref<200x384xf32, #tpu.memory_space<vmem>>, vector<200x384xf32>
    %cst = arith.constant dense<0.000000e+00> : vector<32x384xf32>
    %54 = tpu.matmul %52, %53, %cst {dimension_numbers = #tpu.dot_dimension_numbers<[1], [0], [0], [1], [0, 0, 1, 1], [], []>} : vector<32x200xf32>, vector<200x384xf32>, vector<32x384xf32> -> vector<32x384xf32>
    %cst_32 = arith.constant 0.000000e+00 : f32
    %cst_33 = arith.constant 6.400000e+00 : f32
    %55 = vector.broadcast %cst_32 : f32 to vector<32x384xf32>
    %56 = arith.maximumf %55, %54 : vector<32x384xf32>
    %57 = vector.broadcast %cst_33 : f32 to vector<32x384xf32>
    %58 = arith.minimumf %57, %56 : vector<32x384xf32>
    %c0_34 = arith.constant 0 : index
    %c0_35 = arith.constant 0 : index
    %59 = vector.load %arg3[%c0_34, %c0_35] : memref<1x384xf32, #tpu.memory_space<vmem>>, vector<1x384xf32>
    %60 = vector.broadcast %59 : vector<1x384xf32> to vector<32x384xf32>
    %61 = arith.mulf %58, %60 : vector<32x384xf32>
    %c1_i32 = arith.constant 1 : i32
    %62 = tpu.dynamic_rotate %61 by %c1_i32 dim 1 : vector<32x384xf32>, i32 -> vector<32x384xf32>
    %c383_i32 = arith.constant 383 : i32
    %63 = tpu.dynamic_rotate %61 by %c383_i32 dim 1 : vector<32x384xf32>, i32 -> vector<32x384xf32>
    %64 = arith.maximumf %62, %63 : vector<32x384xf32>
    %65 = arith.maximumf %61, %64 : vector<32x384xf32>
    %c21_i32 = arith.constant 21 : i32
    %66 = tpu.dynamic_rotate %65 by %c21_i32 dim 1 : vector<32x384xf32>, i32 -> vector<32x384xf32>
    %c363_i32 = arith.constant 363 : i32
    %67 = tpu.dynamic_rotate %65 by %c363_i32 dim 1 : vector<32x384xf32>, i32 -> vector<32x384xf32>
    %68 = arith.maximumf %66, %67 : vector<32x384xf32>
    %69 = arith.maximumf %65, %68 : vector<32x384xf32>
    %c0_36 = arith.constant 0 : index
    %c0_37 = arith.constant 0 : index
    %c0_38 = arith.constant 0 : index
    %70 = vector.load %arg4[%c0_36, %c0_37, %c0_38] : memref<1x32x384xf32, #tpu.memory_space<vmem>>, vector<1x32x384xf32>
    %71 = vector.shape_cast %70 : vector<1x32x384xf32> to vector<32x384xf32>
    %72 = vector.shape_cast %69 : vector<32x384xf32> to vector<1x32x384xf32>
    tpu.vector_store %arg4[%c0_36, %c0_37, %c0_38], %72 {strides = array<i32>} : memref<1x32x384xf32, #tpu.memory_space<vmem>>, vector<1x32x384xf32>,
    return
  }
  func.func @transform_0(%arg0: i32) -> (i32, i32, i32) {
    %c0_i32 = arith.constant 0 : i32
    %c0_i32_0 = arith.constant 0 : i32
    %c0_i32_1 = arith.constant 0 : i32
    return %arg0, %c0_i32, %c0_i32_0 : i32, i32, i32
  }
  func.func @transform_1(%arg0: i32) -> (i32, i32) {
    %c0_i32 = arith.constant 0 : i32
    %c0_i32_0 = arith.constant 0 : i32
    %c0_i32_1 = arith.constant 0 : i32
    return %c0_i32, %c0_i32_0 : i32, i32
  }
  func.func @transform_2(%arg0: i32) -> (i32, i32) {
    %c0_i32 = arith.constant 0 : i32
    %c0_i32_0 = arith.constant 0 : i32
    %c0_i32_1 = arith.constant 0 : i32
    return %c0_i32, %c0_i32_0 : i32, i32
  }
  func.func @transform_3(%arg0: i32) -> (i32, i32, i32) {
    %c0_i32 = arith.constant 0 : i32
    %c0_i32_0 = arith.constant 0 : i32
    %c0_i32_1 = arith.constant 0 : i32
    return %arg0, %c0_i32, %c0_i32_0 : i32, i32, i32
  }
}

</mosaic_0001>

<llo_original>
// kernel: model_forward.1
$region0: #{model_forward.1}
  #allocation0 [shape = 'u32[]', space=smem, size = 0x4, offset = 0x4, fixed_abs, tag = 'smem constant byte address 0x4 - core index']
  #allocation1 [shape = 'u32[72,128]{1,0:T(1,128)}', space=vmem, size = 0x9000, scoped, tag = 'internal scratch']
  #allocation2 [shape = 'f32[200,384]{1,0:T(8,128)}', space=vmem, size = 0x4b000, scoped, tag = 'scratch operand']
  %s0 = inlined_call_operand.vmem [shape: f32[2,8,512], index: 0, kind: input, shape index: {}]
  %s1 = inlined_call_operand.vmem [shape: f32[32,200], index: 1, kind: input, shape index: {}]
  %s2 = inlined_call_operand.vmem [shape: f32[1,384], index: 2, kind: input, shape index: {}]
  %s3 = inlined_call_operand.vmem [shape: f32[2,32,384], index: 3, kind: output, shape index: {}]
  %s4 = sld [smem:[#allocation0]]
  $region45: #{model_forward.1} parent=0
    _
  %s6 = ssub.s32 1, %s4
  %s7 = scalar_select 0, %s6, %s4
  loop: start=0, step=1, limit=4
  $region2: #{model_forward.1} parent=0 // loop_pre_header
    _
  $region3: #{model_forward.1} parent=0 // loop_header
    %s9 = sphi 0, %s13
    %p10 = scmp.ge.s32.totalorder %s9, 4
    %s19 = sphi 0, %s21
    %s22 = sphi 0, %s19
    %s23 = sphi 0, %s22
    %s39 = sphi 0, %s23
    %s43 = sphi 0, %s43
    %s45 = sphi 0, %s43
    %s46 = sphi 0, %s45
    %s60 = sphi 0, %s46
    %s64 = sphi 0, %s64
    %s66 = sphi 0, %s64
    %s67 = sphi 0, %s66
    %s81 = sphi 0, %s67
    %s87 = sphi 0, %s89
    %s90 = sphi 0, %s87
    %s91 = sphi 0, %s90
    %s107 = sphi 0, %s91
  $region4: #{model_forward.1} parent=0 // loop_header_branch
    %12 = sbr.rel (%p10) target = $region8
  $region5: #{model_forward.1} parent=0 // loop_body
    %s14 = ssub.s32 %s9, 1
    %s15 = ssub.s32 %s9, 2
    %s16 = sadd.s32 %s9, 1
    %s17 = ssub.s32 %s9, %s16
    %p18 = scmp.eq.s32.totalorder %s17, 0
    %s20 = sadd.s32 %s19, 1
    %s21 = scalar_select %p18, %s19, %s20
    %p24 = pneg %p18
    %p25 = scmp.eq.s32.totalorder %s9, 1
    %p26 = por %p24, %p25
    %p27 = scmp.ne.s32.totalorder %s19, %s22
    %p28 = scmp.eq.s32.totalorder %s9, 0
    %p29 = por %p27, %p28
    %p30 = scmp.ne.s32.totalorder %s19, %s22
    %p31 = scmp.eq.s32.totalorder %s14, 1
    %p32 = por %p30, %p31
    %p33 = scmp.ne.s32.totalorder %s22, %s23
    %p34 = scmp.eq.s32.totalorder %s14, 0
    %p35 = por %p33, %p34
    %p36 = scmp.ne.s32.totalorder %s22, %s23
    %p37 = scmp.eq.s32.totalorder %s15, 1
    %p38 = por %p36, %p37
    %p40 = scmp.ne.s32.totalorder %s23, %s39
    %p41 = scmp.eq.s32.totalorder %s15, 0
    %p42 = por %p40, %p41
    %s44 = sadd.s32 %s43, 1
    %p47 = scmp.eq.s32.totalorder %s9, 1
    %p48 = scmp.ne.s32.totalorder %s43, %s45
    %p49 = scmp.eq.s32.totalorder %s9, 0
    %p50 = por %p48, %p49
    %p51 = scmp.ne.s32.totalorder %s43, %s45
    %p52 = scmp.eq.s32.totalorder %s14, 1
    %p53 = por %p51, %p52
    %p54 = scmp.ne.s32.totalorder %s45, %s46
    %p55 = scmp.eq.s32.totalorder %s14, 0
    %p56 = por %p54, %p55
    %p57 = scmp.ne.s32.totalorder %s45, %s46
    %p58 = scmp.eq.s32.totalorder %s15, 1
    %p59 = por %p57, %p58
    %p61 = scmp.ne.s32.totalorder %s46, %s60
    %p62 = scmp.eq.s32.totalorder %s15, 0
    %p63 = por %p61, %p62
    %s65 = sadd.s32 %s64, 1
    %p68 = scmp.eq.s32.totalorder %s9, 1
    %p69 = scmp.ne.s32.totalorder %s64, %s66
    %p70 = scmp.eq.s32.totalorder %s9, 0
    %p71 = por %p69, %p70
    %p72 = scmp.ne.s32.totalorder %s64, %s66
    %p73 = scmp.eq.s32.totalorder %s14, 1
    %p74 = por %p72, %p73
    %p75 = scmp.ne.s32.totalorder %s66, %s67
    %p76 = scmp.eq.s32.totalorder %s14, 0
    %p77 = por %p75, %p76
    %p78 = scmp.ne.s32.totalorder %s66, %s67
    %p79 = scmp.eq.s32.totalorder %s15, 1
    %p80 = por %p78, %p79
    %p82 = scmp.ne.s32.totalorder %s67, %s81
    %p83 = scmp.eq.s32.totalorder %s15, 0
    %p84 = por %p82, %p83
    %s85 = ssub.s32 %s9, %s16
    %p86 = scmp.eq.s32.totalorder %s85, 0
    %s88 = sadd.s32 %s87, 1
    %s89 = scalar_select %p86, %s87, %s88
    %p92 = pneg %p86
    %p93 = scmp.eq.s32.totalorder %s9, 1
    %p94 = por %p92, %p93
    %p95 = scmp.ne.s32.totalorder %s87, %s90
    %p96 = scmp.eq.s32.totalorder %s9, 0
    %p97 = por %p95, %p96
    %p98 = scmp.ne.s32.totalorder %s87, %s90
    %p99 = scmp.eq.s32.totalorder %s14, 1
    %p100 = por %p98, %p99
    %p101 = scmp.ne.s32.totalorder %s90, %s91
    %p102 = scmp.eq.s32.totalorder %s14, 0
    %p103 = por %p101, %p102
    %p104 = scmp.ne.s32.totalorder %s90, %s91
    %p105 = scmp.eq.s32.totalorder %s15, 1
    %p106 = por %p104, %p105
    %p108 = scmp.ne.s32.totalorder %s91, %s107
    %p109 = scmp.eq.s32.totalorder %s15, 0
    %p110 = por %p108, %p109
    %p111 = scmp.le.s32.totalorder 1, %s9
    %p112 = scmp.lt.s32.totalorder %s9, 3
    %p113 = pnand %p111, %p112
    %p114 = pneg %p113
    // Predicated region
    $region9: #{model_forward.1} parent=5 // pred_check
      _
    $region10: #{model_forward.1} parent=5 // pred_check_branch
      %116 = sbr.rel (%p113) target = $region12
    $region11: #{model_forward.1} parent=5 // pred_region
      %s117 = ssub.s32 %s9, 1
      // Predicated region
      $region13: #{model_forward.1} parent=11 // pred_check
        %p118 = pneg %p56
      $region14: #{model_forward.1} parent=11 // pred_check_branch
        %120 = sbr.rel (%p118) target = $region16
      $region15: #{model_forward.1} parent=11 // pred_region
        _
      $region16: #{model_forward.1} parent=11 // pred_fallthru
        _
      // Predicated region
      $region17: #{model_forward.1} parent=11 // pred_check
        %p121 = pneg %p77
      $region18: #{model_forward.1} parent=11 // pred_check_branch
        %123 = sbr.rel (%p121) target = $region20
      $region19: #{model_forward.1} parent=11 // pred_region
        _
      $region20: #{model_forward.1} parent=11 // pred_fallthru
        _
    $region12: #{model_forward.1} parent=5 // pred_fallthru
      _
    %p124 = scmp.lt.s32.totalorder %s9, 2
    // Predicated region
    $region21: #{model_forward.1} parent=5 // pred_check
      %p125 = pneg %p124
    $region22: #{model_forward.1} parent=5 // pred_check_branch
      %127 = sbr.rel (%p125) target = $region24
    $region23: #{model_forward.1} parent=5 // pred_region
      // Predicated region
      $region25: #{model_forward.1} parent=23 // pred_check
        %p128 = pneg %p29
      $region26: #{model_forward.1} parent=23 // pred_check_branch
        %130 = sbr.rel (%p128) target = $region28
      $region27: #{model_forward.1} parent=23 // pred_region
        %p131 = scmp.lt.s32.totalorder %s9, 1
        %s132 = scalar_select %p131, %s9, 1
        %s133 = smul.addr %s132, 4
        %s134 = smul.addr %s133, 8
        %s135 = scalar_lea.vmem %s0, %s134
      $region28: #{model_forward.1} parent=23 // pred_fallthru
        _
    $region24: #{model_forward.1} parent=5 // pred_fallthru
      _
    %p136 = scmp.le.s32.totalorder 1, %s9
    %p137 = scmp.lt.s32.totalorder %s9, 3
    %p138 = pnand %p136, %p137
    %p139 = pneg %p138
    // Predicated region
    $region29: #{model_forward.1} parent=5 // pred_check
      _
    $region30: #{model_forward.1} parent=5 // pred_check_branch
      %141 = sbr.rel (%p138) target = $region32
    $region31: #{model_forward.1} parent=5 // pred_region
      %s142 = ssub.s32 %s9, 1
      %p143 = scmp.lt.s32.totalorder %s14, 1
      %s144 = scalar_select %p143, %s14, 1
      %s145 = smul.addr %s144, 4
      %s146 = smul.addr %s145, 8
      %s147 = scalar_lea.vmem %s0, %s146
      %p148 = pneg %p35
      %p149 = pneg %p32
      %p150 = pneg %p56
      %p151 = pneg %p53
      %p152 = pneg %p77
      %p153 = pneg %p74
      %p154 = pneg %p103
      %p155 = pneg %p100
      %p156 = scmp.lt.s32.totalorder %s14, 1
      %s157 = scalar_select %p156, %s14, 1
      %s158 = smul.addr %s157, 12
      %s159 = smul.addr %s158, 8
      %s160 = scalar_lea.vmem %s3, %s159
      %p161 = scmp.lt.s32.totalorder %s14, 1
      %s162 = scalar_select %p161, %s14, 1
      %s163 = smul.addr %s162, 4
      %s164 = smul.addr %s163, 8
      %s165 = scalar_lea.vmem %s0, %s164
      %p166 = scmp.lt.s32.totalorder %s14, 1
      %s167 = scalar_select %p166, %s14, 1
      %s168 = smul.addr %s167, 12
      %s169 = smul.addr %s168, 8
      %s170 = scalar_lea.vmem %s3, %s169
      %v171 = vld [vmem:[%s165] sm:$0xff]
      %v172 = vld [vmem:[%s165 + $0x8] sm:$0xff]
      %v173 = vld [vmem:[%s165 + $0x10] sm:$0xff]
      %v174 = vld [vmem:[%s165 + $0x18] sm:$0xff]
      %175 = vst [vmem:[#allocation2] sm:$0xff] %v171
      %176 = vst [vmem:[#allocation2 + $0x8] sm:$0xff] %v172
      %177 = vst [vmem:[#allocation2 + $0x10] sm:$0xff] %v173
      %182 = vrot.lane.b32.xlu0 %v171, 127
      %v183 = vpop.permute.xlu0 %182
      %184 = vrot.lane.b32.xlu0 %v172, 127
      %v185 = vpop.permute.xlu0 %184
      %186 = vrot.lane.b32.xlu0 %v173, 127
      %v187 = vpop.permute.xlu0 %186
      %188 = vrot.lane.b32.xlu0 %v174, 127
      %v189 = vpop.permute.xlu0 %188
      %vm190 = vcmask 1039360
      %v191 = vsel %vm190, %v183, %v185
      %v192 = vsel %vm190, %v185, %v187
      %v193 = vsel %vm190, %v187, %v189
      %197 = vst [vmem:[#allocation2 + $0x18] sm:$0xff] %v191
      %198 = vst [vmem:[#allocation2 + $0x20] sm:$0xff] %v192
      %199 = vst [vmem:[#allocation2 + $0x28] sm:$0xff] %v193
      %200 = vrot.lane.b32.xlu0 %v171, 126
      %v201 = vpop.permute.xlu0 %200
      %202 = vrot.lane.b32.xlu0 %v172, 126
      %v203 = vpop.permute.xlu0 %202
      %204 = vrot.lane.b32.xlu0 %v173, 126
      %v205 = vpop.permute.xlu0 %204
      %206 = vrot.lane.b32.xlu0 %v174, 126
      %v207 = vpop.permute.xlu0 %206
      %vm208 = vcmask 1031168
      %v209 = vsel %vm208, %v201, %v203
      %v210 = vsel %vm208, %v203, %v205
      %v211 = vsel %vm208, %v205, %v207
      %215 = vst [vmem:[#allocation2 + $0x30] sm:$0xff] %v209
      %216 = vst [vmem:[#allocation2 + $0x38] sm:$0xff] %v210
      %217 = vst [vmem:[#allocation2 + $0x40] sm:$0xff] %v211
      %218 = vrot.lane.b32.xlu0 %v171, 125
      %v219 = vpop.permute.xlu0 %218
      %220 = vrot.lane.b32.xlu0 %v172, 125
      %v221 = vpop.permute.xlu0 %220
      %222 = vrot.lane.b32.xlu0 %v173, 125
      %v223 = vpop.permute.xlu0 %222
      %224 = vrot.lane.b32.xlu0 %v174, 125
      %v225 = vpop.permute.xlu0 %224
      %vm226 = vcmask 1022976
      %v227 = vsel %vm226, %v219, %v221
      %v228 = vsel %vm226, %v221, %v223
      %v229 = vsel %vm226, %v223, %v225
      %233 = vst [vmem:[#allocation2 + $0x48] sm:$0xff] %v227
      %234 = vst [vmem:[#allocation2 + $0x50] sm:$0xff] %v228
      %235 = vst [vmem:[#allocation2 + $0x58] sm:$0xff] %v229
      %236 = vrot.lane.b32.xlu0 %v171, 124
      %v237 = vpop.permute.xlu0 %236
      %238 = vrot.lane.b32.xlu0 %v172, 124
      %v239 = vpop.permute.xlu0 %238
      %240 = vrot.lane.b32.xlu0 %v173, 124
      %v241 = vpop.permute.xlu0 %240
      %242 = vrot.lane.b32.xlu0 %v174, 124
      %v243 = vpop.permute.xlu0 %242
      %vm244 = vcmask 1014784
      %v245 = vsel %vm244, %v237, %v239
      %v246 = vsel %vm244, %v239, %v241
      %v247 = vsel %vm244, %v241, %v243
      %251 = vst [vmem:[#allocation2 + $0x60] sm:$0xff] %v245
      %252 = vst [vmem:[#allocation2 + $0x68] sm:$0xff] %v246
      %253 = vst [vmem:[#allocation2 + $0x70] sm:$0xff] %v247
      %254 = vrot.lane.b32.xlu0 %v171, 107
      %v255 = vpop.permute.xlu0 %254
      %256 = vrot.lane.b32.xlu0 %v172, 107
      %v257 = vpop.permute.xlu0 %256
      %258 = vrot.lane.b32.xlu0 %v173, 107
      %v259 = vpop.permute.xlu0 %258
      %260 = vrot.lane.b32.xlu0 %v174, 107
      %v261 = vpop.permute.xlu0 %260
      %vm262 = vcmask 875520
      %v263 = vsel %vm262, %v255, %v257
      %v264 = vsel %vm262, %v257, %v259
      %v265 = vsel %vm262, %v259, %v261
      %269 = vst [vmem:[#allocation2 + $0x78] sm:$0xff] %v263
      %270 = vst [vmem:[#allocation2 + $0x80] sm:$0xff] %v264
      %271 = vst [vmem:[#allocation2 + $0x88] sm:$0xff] %v265
      %272 = vrot.lane.b32.xlu0 %v171, 106
      %v273 = vpop.permute.xlu0 %272
      %274 = vrot.lane.b32.xlu0 %v172, 106
      %v275 = vpop.permute.xlu0 %274
      %276 = vrot.lane.b32.xlu0 %v173, 106
      %v277 = vpop.permute.xlu0 %276
      %278 = vrot.lane.b32.xlu0 %v174, 106
      %v279 = vpop.permute.xlu0 %278
      %vm280 = vcmask 867328
      %v281 = vsel %vm280, %v273, %v275
      %v282 = vsel %vm280, %v275, %v277
      %v283 = vsel %vm280, %v277, %v279
      %287 = vst [vmem:[#allocation2 + $0x90] sm:$0xff] %v281
      %288 = vst [vmem:[#allocation2 + $0x98] sm:$0xff] %v282
      %289 = vst [vmem:[#allocation2 + $0xa0] sm:$0xff] %v283
      %290 = vrot.lane.b32.xlu0 %v171, 105
      %v291 = vpop.permute.xlu0 %290
      %292 = vrot.lane.b32.xlu0 %v172, 105
      %v293 = vpop.permute.xlu0 %292
      %294 = vrot.lane.b32.xlu0 %v173, 105
      %v295 = vpop.permute.xlu0 %294
      %296 = vrot.lane.b32.xlu0 %v174, 105
      %v297 = vpop.permute.xlu0 %296
      %vm298 = vcmask 859136
      %v299 = vsel %vm298, %v291, %v293
      %v300 = vsel %vm298, %v293, %v295
      %v301 = vsel %vm298, %v295, %v297
      %305 = vst [vmem:[#allocation2 + $0xa8] sm:$0xff] %v299
      %306 = vst [vmem:[#allocation2 + $0xb0] sm:$0xff] %v300
      %307 = vst [vmem:[#allocation2 + $0xb8] sm:$0xff] %v301
      %308 = vrot.lane.b32.xlu0 %v171, 104
      %v309 = vpop.permute.xlu0 %308
      %310 = vrot.lane.b32.xlu0 %v172, 104
      %v311 = vpop.permute.xlu0 %310
      %312 = vrot.lane.b32.xlu0 %v173, 104
      %v313 = vpop.permute.xlu0 %312
      %314 = vrot.lane.b32.xlu0 %v174, 104
      %v315 = vpop.permute.xlu0 %314
      %vm316 = vcmask 850944
      %v317 = vsel %vm316, %v309, %v311
      %v318 = vsel %vm316, %v311, %v313
      %v319 = vsel %vm316, %v313, %v315
      %323 = vst [vmem:[#allocation2 + $0xc0] sm:$0xff] %v317
      %324 = vst [vmem:[#allocation2 + $0xc8] sm:$0xff] %v318
      %325 = vst [vmem:[#allocation2 + $0xd0] sm:$0xff] %v319
      %326 = vrot.lane.b32.xlu0 %v171, 103
      %v327 = vpop.permute.xlu0 %326
      %328 = vrot.lane.b32.xlu0 %v172, 103
      %v329 = vpop.permute.xlu0 %328
      %330 = vrot.lane.b32.xlu0 %v173, 103
      %v331 = vpop.permute.xlu0 %330
      %332 = vrot.lane.b32.xlu0 %v174, 103
      %v333 = vpop.permute.xlu0 %332
      %vm334 = vcmask 842752
      %v335 = vsel %vm334, %v327, %v329
      %v336 = vsel %vm334, %v329, %v331
      %v337 = vsel %vm334, %v331, %v333
      %341 = vst [vmem:[#allocation2 + $0xd8] sm:$0xff] %v335
      %342 = vst [vmem:[#allocation2 + $0xe0] sm:$0xff] %v336
      %343 = vst [vmem:[#allocation2 + $0xe8] sm:$0xff] %v337
      %344 = vrot.lane.b32.xlu0 %v171, 86
      %v345 = vpop.permute.xlu0 %344
      %346 = vrot.lane.b32.xlu0 %v172, 86
      %v347 = vpop.permute.xlu0 %346
      %348 = vrot.lane.b32.xlu0 %v173, 86
      %v349 = vpop.permute.xlu0 %348
      %350 = vrot.lane.b32.xlu0 %v174, 86
      %v351 = vpop.permute.xlu0 %350
      %vm352 = vcmask 703488
      %v353 = vsel %vm352, %v345, %v347
      %v354 = vsel %vm352, %v347, %v349
      %v355 = vsel %vm352, %v349, %v351
      %359 = vst [vmem:[#allocation2 + $0xf0] sm:$0xff] %v353
      %360 = vst [vmem:[#allocation2 + $0xf8] sm:$0xff] %v354
      %361 = vst [vmem:[#allocation2 + $0x100] sm:$0xff] %v355
      %362 = vrot.lane.b32.xlu0 %v171, 85
      %v363 = vpop.permute.xlu0 %362
      %364 = vrot.lane.b32.xlu0 %v172, 85
      %v365 = vpop.permute.xlu0 %364
      %366 = vrot.lane.b32.xlu0 %v173, 85
      %v367 = vpop.permute.xlu0 %366
      %368 = vrot.lane.b32.xlu0 %v174, 85
      %v369 = vpop.permute.xlu0 %368
      %vm370 = vcmask 695296
      %v371 = vsel %vm370, %v363, %v365
      %v372 = vsel %vm370, %v365, %v367
      %v373 = vsel %vm370, %v367, %v369
      %377 = vst [vmem:[#allocation2 + $0x108] sm:$0xff] %v371
      %378 = vst [vmem:[#allocation2 + $0x110] sm:$0xff] %v372
      %379 = vst [vmem:[#allocation2 + $0x118] sm:$0xff] %v373
      %380 = vrot.lane.b32.xlu0 %v171, 84
      %v381 = vpop.permute.xlu0 %380
      %382 = vrot.lane.b32.xlu0 %v172, 84
      %v383 = vpop.permute.xlu0 %382
      %384 = vrot.lane.b32.xlu0 %v173, 84
      %v385 = vpop.permute.xlu0 %384
      %386 = vrot.lane.b32.xlu0 %v174, 84
      %v387 = vpop.permute.xlu0 %386
      %vm388 = vcmask 687104
      %v389 = vsel %vm388, %v381, %v383
      %v390 = vsel %vm388, %v383, %v385
      %v391 = vsel %vm388, %v385, %v387
      %395 = vst [vmem:[#allocation2 + $0x120] sm:$0xff] %v389
      %396 = vst [vmem:[#allocation2 + $0x128] sm:$0xff] %v390
      %397 = vst [vmem:[#allocation2 + $0x130] sm:$0xff] %v391
      %398 = vrot.lane.b32.xlu0 %v171, 83
      %v399 = vpop.permute.xlu0 %398
      %400 = vrot.lane.b32.xlu0 %v172, 83
      %v401 = vpop.permute.xlu0 %400
      %402 = vrot.lane.b32.xlu0 %v173, 83
      %v403 = vpop.permute.xlu0 %402
      %404 = vrot.lane.b32.xlu0 %v174, 83
      %v405 = vpop.permute.xlu0 %404
      %vm406 = vcmask 678912
      %v407 = vsel %vm406, %v399, %v401
      %v408 = vsel %vm406, %v401, %v403
      %v409 = vsel %vm406, %v403, %v405
      %413 = vst [vmem:[#allocation2 + $0x138] sm:$0xff] %v407
      %414 = vst [vmem:[#allocation2 + $0x140] sm:$0xff] %v408
      %415 = vst [vmem:[#allocation2 + $0x148] sm:$0xff] %v409
      %416 = vrot.lane.b32.xlu0 %v171, 82
      %v417 = vpop.permute.xlu0 %416
      %418 = vrot.lane.b32.xlu0 %v172, 82
      %v419 = vpop.permute.xlu0 %418
      %420 = vrot.lane.b32.xlu0 %v173, 82
      %v421 = vpop.permute.xlu0 %420
      %422 = vrot.lane.b32.xlu0 %v174, 82
      %v423 = vpop.permute.xlu0 %422
      %vm424 = vcmask 670720
      %v425 = vsel %vm424, %v417, %v419
      %v426 = vsel %vm424, %v419, %v421
      %v427 = vsel %vm424, %v421, %v423
      %431 = vst [vmem:[#allocation2 + $0x150] sm:$0xff] %v425
      %432 = vst [vmem:[#allocation2 + $0x158] sm:$0xff] %v426
      %433 = vst [vmem:[#allocation2 + $0x160] sm:$0xff] %v427
      %434 = vrot.lane.b32.xlu0 %v171, 65
      %v435 = vpop.permute.xlu0 %434
      %436 = vrot.lane.b32.xlu0 %v172, 65
      %v437 = vpop.permute.xlu0 %436
      %438 = vrot.lane.b32.xlu0 %v173, 65
      %v439 = vpop.permute.xlu0 %438
      %440 = vrot.lane.b32.xlu0 %v174, 65
      %v441 = vpop.permute.xlu0 %440
      %vm442 = vcmask 531456
      %v443 = vsel %vm442, %v435, %v437
      %v444 = vsel %vm442, %v437, %v439
      %v445 = vsel %vm442, %v439, %v441
      %449 = vst [vmem:[#allocation2 + $0x168] sm:$0xff] %v443
      %450 = vst [vmem:[#allocation2 + $0x170] sm:$0xff] %v444
      %451 = vst [vmem:[#allocation2 + $0x178] sm:$0xff] %v445
      %452 = vrot.lane.b32.xlu0 %v171, 64
      %v453 = vpop.permute.xlu0 %452
      %454 = vrot.lane.b32.xlu0 %v172, 64
      %v455 = vpop.permute.xlu0 %454
      %456 = vrot.lane.b32.xlu0 %v173, 64
      %v457 = vpop.permute.xlu0 %456
      %458 = vrot.lane.b32.xlu0 %v174, 64
      %v459 = vpop.permute.xlu0 %458
      %vm460 = vcmask 523264
      %v461 = vsel %vm460, %v453, %v455
      %v462 = vsel %vm460, %v455, %v457
      %v463 = vsel %vm460, %v457, %v459
      %467 = vst [vmem:[#allocation2 + $0x180] sm:$0xff] %v461
      %468 = vst [vmem:[#allocation2 + $0x188] sm:$0xff] %v462
      %469 = vst [vmem:[#allocation2 + $0x190] sm:$0xff] %v463
      %470 = vrot.lane.b32.xlu0 %v171, 63
      %v471 = vpop.permute.xlu0 %470
      %472 = vrot.lane.b32.xlu0 %v172, 63
      %v473 = vpop.permute.xlu0 %472
      %474 = vrot.lane.b32.xlu0 %v173, 63
      %v475 = vpop.permute.xlu0 %474
      %476 = vrot.lane.b32.xlu0 %v174, 63
      %v477 = vpop.permute.xlu0 %476
      %vm478 = vcmask 515072
      %v479 = vsel %vm478, %v471, %v473
      %v480 = vsel %vm478, %v473, %v475
      %v481 = vsel %vm478, %v475, %v477
      %485 = vst [vmem:[#allocation2 + $0x198] sm:$0xff] %v479
      %486 = vst [vmem:[#allocation2 + $0x1a0] sm:$0xff] %v480
      %487 = vst [vmem:[#allocation2 + $0x1a8] sm:$0xff] %v481
      %488 = vrot.lane.b32.xlu0 %v171, 62
      %v489 = vpop.permute.xlu0 %488
      %490 = vrot.lane.b32.xlu0 %v172, 62
      %v491 = vpop.permute.xlu0 %490
      %492 = vrot.lane.b32.xlu0 %v173, 62
      %v493 = vpop.permute.xlu0 %492
      %494 = vrot.lane.b32.xlu0 %v174, 62
      %v495 = vpop.permute.xlu0 %494
      %vm496 = vcmask 506880
      %v497 = vsel %vm496, %v489, %v491
      %v498 = vsel %vm496, %v491, %v493
      %v499 = vsel %vm496, %v493, %v495
      %503 = vst [vmem:[#allocation2 + $0x1b0] sm:$0xff] %v497
      %504 = vst [vmem:[#allocation2 + $0x1b8] sm:$0xff] %v498
      %505 = vst [vmem:[#allocation2 + $0x1c0] sm:$0xff] %v499
      %506 = vrot.lane.b32.xlu0 %v171, 61
      %v507 = vpop.permute.xlu0 %506
      %508 = vrot.lane.b32.xlu0 %v172, 61
      %v509 = vpop.permute.xlu0 %508
      %510 = vrot.lane.b32.xlu0 %v173, 61
      %v511 = vpop.permute.xlu0 %510
      %512 = vrot.lane.b32.xlu0 %v174, 61
      %v513 = vpop.permute.xlu0 %512
      %vm514 = vcmask 498688
      %v515 = vsel %vm514, %v507, %v509
      %v516 = vsel %vm514, %v509, %v511
      %v517 = vsel %vm514, %v511, %v513
      %521 = vst [vmem:[#allocation2 + $0x1c8] sm:$0xff] %v515
      %522 = vst [vmem:[#allocation2 + $0x1d0] sm:$0xff] %v516
      %523 = vst [vmem:[#allocation2 + $0x1d8] sm:$0xff] %v517
      %524 = vrot.lane.b32.xlu0 %v171, 44
      %v525 = vpop.permute.xlu0 %524
      %526 = vrot.lane.b32.xlu0 %v172, 44
      %v527 = vpop.permute.xlu0 %526
      %528 = vrot.lane.b32.xlu0 %v173, 44
      %v529 = vpop.permute.xlu0 %528
      %530 = vrot.lane.b32.xlu0 %v174, 44
      %v531 = vpop.permute.xlu0 %530
      %vm532 = vcmask 359424
      %v533 = vsel %vm532, %v525, %v527
      %v534 = vsel %vm532, %v527, %v529
      %v535 = vsel %vm532, %v529, %v531
      %539 = vst [vmem:[#allocation2 + $0x1e0] sm:$0xff] %v533
      %540 = vst [vmem:[#allocation2 + $0x1e8] sm:$0xff] %v534
      %541 = vst [vmem:[#allocation2 + $0x1f0] sm:$0xff] %v535
      %542 = vrot.lane.b32.xlu0 %v171, 43
      %v543 = vpop.permute.xlu0 %542
      %544 = vrot.lane.b32.xlu0 %v172, 43
      %v545 = vpop.permute.xlu0 %544
      %546 = vrot.lane.b32.xlu0 %v173, 43
      %v547 = vpop.permute.xlu0 %546
      %548 = vrot.lane.b32.xlu0 %v174, 43
      %v549 = vpop.permute.xlu0 %548
      %vm550 = vcmask 351232
      %v551 = vsel %vm550, %v543, %v545
      %v552 = vsel %vm550, %v545, %v547
      %v553 = vsel %vm550, %v547, %v549
      %557 = vst [vmem:[#allocation2 + $0x1f8] sm:$0xff] %v551
      %558 = vst [vmem:[#allocation2 + $0x200] sm:$0xff] %v552
      %559 = vst [vmem:[#allocation2 + $0x208] sm:$0xff] %v553
      %560 = vrot.lane.b32.xlu0 %v171, 42
      %v561 = vpop.permute.xlu0 %560
      %562 = vrot.lane.b32.xlu0 %v172, 42
      %v563 = vpop.permute.xlu0 %562
      %564 = vrot.lane.b32.xlu0 %v173, 42
      %v565 = vpop.permute.xlu0 %564
      %566 = vrot.lane.b32.xlu0 %v174, 42
      %v567 = vpop.permute.xlu0 %566
      %vm568 = vcmask 343040
      %v569 = vsel %vm568, %v561, %v563
      %v570 = vsel %vm568, %v563, %v565
      %v571 = vsel %vm568, %v565, %v567
      %575 = vst [vmem:[#allocation2 + $0x210] sm:$0xff] %v569
      %576 = vst [vmem:[#allocation2 + $0x218] sm:$0xff] %v570
      %577 = vst [vmem:[#allocation2 + $0x220] sm:$0xff] %v571
      %578 = vrot.lane.b32.xlu0 %v171, 41
      %v579 = vpop.permute.xlu0 %578
      %580 = vrot.lane.b32.xlu0 %v172, 41
      %v581 = vpop.permute.xlu0 %580
      %582 = vrot.lane.b32.xlu0 %v173, 41
      %v583 = vpop.permute.xlu0 %582
      %584 = vrot.lane.b32.xlu0 %v174, 41
      %v585 = vpop.permute.xlu0 %584
      %vm586 = vcmask 334848
      %v587 = vsel %vm586, %v579, %v581
      %v588 = vsel %vm586, %v581, %v583
      %v589 = vsel %vm586, %v583, %v585
      %593 = vst [vmem:[#allocation2 + $0x228] sm:$0xff] %v587
      %594 = vst [vmem:[#allocation2 + $0x230] sm:$0xff] %v588
      %595 = vst [vmem:[#allocation2 + $0x238] sm:$0xff] %v589
      %596 = vrot.lane.b32.xlu0 %v171, 40
      %v597 = vpop.permute.xlu0 %596
      %598 = vrot.lane.b32.xlu0 %v172, 40
      %v599 = vpop.permute.xlu0 %598
      %600 = vrot.lane.b32.xlu0 %v173, 40
      %v601 = vpop.permute.xlu0 %600
      %602 = vrot.lane.b32.xlu0 %v174, 40
      %v603 = vpop.permute.xlu0 %602
      %vm604 = vcmask 326656
      %v605 = vsel %vm604, %v597, %v599
      %v606 = vsel %vm604, %v599, %v601
      %v607 = vsel %vm604, %v601, %v603
      %611 = vst [vmem:[#allocation2 + $0x240] sm:$0xff] %v605
      %612 = vst [vmem:[#allocation2 + $0x248] sm:$0xff] %v606
      %613 = vst [vmem:[#allocation2 + $0x250] sm:$0xff] %v607
      %v614 = vld [vmem:[%s1] sm:$0xff]
      %v615 = vld [vmem:[%s1 + $0x8] sm:$0xff]
      %v616 = vld [vmem:[%s1 + $0x10] sm:$0xff]
      %v617 = vld [vmem:[%s1 + $0x18] sm:$0xff]
      %v618 = vld [vmem:[%s1 + $0x20] sm:$0xff]
      %v619 = vld [vmem:[%s1 + $0x28] sm:$0xff]
      %v620 = vld [vmem:[%s1 + $0x30] sm:$0xff]
      %v621 = vld [vmem:[%s1 + $0x38] sm:$0xff]
      %v622 = vld [vmem:[#allocation2] sm:$0xff]
      %v623 = vld [vmem:[#allocation2 + $0x8] sm:$0xff]
      %v624 = vld [vmem:[#allocation2 + $0x10] sm:$0xff]
      %v625 = vld [vmem:[#allocation2 + $0x18] sm:$0xff]
      %v626 = vld [vmem:[#allocation2 + $0x20] sm:$0xff]
      %v627 = vld [vmem:[#allocation2 + $0x28] sm:$0xff]
      %v628 = vld [vmem:[#allocation2 + $0x30] sm:$0xff]
      %v629 = vld [vmem:[#allocation2 + $0x38] sm:$0xff]
      %v630 = vld [vmem:[#allocation2 + $0x40] sm:$0xff]
      %v631 = vld [vmem:[#allocation2 + $0x48] sm:$0xff]
      %v632 = vld [vmem:[#allocation2 + $0x50] sm:$0xff]
      %v633 = vld [vmem:[#allocation2 + $0x58] sm:$0xff]
      %v634 = vld [vmem:[#allocation2 + $0x60] sm:$0xff]
      %v635 = vld [vmem:[#allocation2 + $0x68] sm:$0xff]
      %v636 = vld [vmem:[#allocation2 + $0x70] sm:$0xff]
      %v637 = vld [vmem:[#allocation2 + $0x78] sm:$0xff]
      %v638 = vld [vmem:[#allocation2 + $0x80] sm:$0xff]
      %v639 = vld [vmem:[#allocation2 + $0x88] sm:$0xff]
      %v640 = vld [vmem:[#allocation2 + $0x90] sm:$0xff]
      %v641 = vld [vmem:[#allocation2 + $0x98] sm:$0xff]
      %v642 = vld [vmem:[#allocation2 + $0xa0] sm:$0xff]
      %v643 = vld [vmem:[#allocation2 + $0xa8] sm:$0xff]
      %v644 = vld [vmem:[#allocation2 + $0xb0] sm:$0xff]
      %v645 = vld [vmem:[#allocation2 + $0xb8] sm:$0xff]
      %v646 = vld [vmem:[#allocation2 + $0xc0] sm:$0xff]
      %v647 = vld [vmem:[#allocation2 + $0xc8] sm:$0xff]
      %v648 = vld [vmem:[#allocation2 + $0xd0] sm:$0xff]
      %v649 = vld [vmem:[#allocation2 + $0xd8] sm:$0xff]
      %v650 = vld [vmem:[#allocation2 + $0xe0] sm:$0xff]
      %v651 = vld [vmem:[#allocation2 + $0xe8] sm:$0xff]
      %v652 = vld [vmem:[#allocation2 + $0xf0] sm:$0xff]
      %v653 = vld [vmem:[#allocation2 + $0xf8] sm:$0xff]
      %v654 = vld [vmem:[#allocation2 + $0x100] sm:$0xff]
      %v655 = vld [vmem:[#allocation2 + $0x108] sm:$0xff]
      %v656 = vld [vmem:[#allocation2 + $0x110] sm:$0xff]
      %v657 = vld [vmem:[#allocation2 + $0x118] sm:$0xff]
      %v658 = vld [vmem:[#allocation2 + $0x120] sm:$0xff]
      %v659 = vld [vmem:[#allocation2 + $0x128] sm:$0xff]
      %v660 = vld [vmem:[#allocation2 + $0x130] sm:$0xff]
      %v661 = vld [vmem:[#allocation2 + $0x138] sm:$0xff]
      %v662 = vld [vmem:[#allocation2 + $0x140] sm:$0xff]
      %v663 = vld [vmem:[#allocation2 + $0x148] sm:$0xff]
      %v664 = vld [vmem:[#allocation2 + $0x150] sm:$0xff]
      %v665 = vld [vmem:[#allocation2 + $0x158] sm:$0xff]
      %v666 = vld [vmem:[#allocation2 + $0x160] sm:$0xff]
      %v667 = vld [vmem:[#allocation2 + $0x168] sm:$0xff]
      %v668 = vld [vmem:[#allocation2 + $0x170] sm:$0xff]
      %v669 = vld [vmem:[#allocation2 + $0x178] sm:$0xff]
      %v670 = vld [vmem:[#allocation2 + $0x180] sm:$0xff]
      %v671 = vld [vmem:[#allocation2 + $0x188] sm:$0xff]
      %v672 = vld [vmem:[#allocation2 + $0x190] sm:$0xff]
      %v673 = vld [vmem:[#allocation2 + $0x198] sm:$0xff]
      %v674 = vld [vmem:[#allocation2 + $0x1a0] sm:$0xff]
      %v675 = vld [vmem:[#allocation2 + $0x1a8] sm:$0xff]
      %v676 = vld [vmem:[#allocation2 + $0x1b0] sm:$0xff]
      %v677 = vld [vmem:[#allocation2 + $0x1b8] sm:$0xff]
      %v678 = vld [vmem:[#allocation2 + $0x1c0] sm:$0xff]
      %v679 = vld [vmem:[#allocation2 + $0x1c8] sm:$0xff]
      %v680 = vld [vmem:[#allocation2 + $0x1d0] sm:$0xff]
      %v681 = vld [vmem:[#allocation2 + $0x1d8] sm:$0xff]
      %v682 = vld [vmem:[#allocation2 + $0x1e0] sm:$0xff]
      %v683 = vld [vmem:[#allocation2 + $0x1e8] sm:$0xff]
      %v684 = vld [vmem:[#allocation2 + $0x1f0] sm:$0xff]
      %v685 = vld [vmem:[#allocation2 + $0x1f8] sm:$0xff]
      %v686 = vld [vmem:[#allocation2 + $0x200] sm:$0xff]
      %v687 = vld [vmem:[#allocation2 + $0x208] sm:$0xff]
      %v688 = vld [vmem:[#allocation2 + $0x210] sm:$0xff]
      %v689 = vld [vmem:[#allocation2 + $0x218] sm:$0xff]
      %v690 = vld [vmem:[#allocation2 + $0x220] sm:$0xff]
      %v691 = vld [vmem:[#allocation2 + $0x228] sm:$0xff]
      %v692 = vld [vmem:[#allocation2 + $0x230] sm:$0xff]
      %v693 = vld [vmem:[#allocation2 + $0x238] sm:$0xff]
      %v694 = vld [vmem:[#allocation2 + $0x240] sm:$0xff]
      %v695 = vld [vmem:[#allocation2 + $0x248] sm:$0xff]
      %v696 = vld [vmem:[#allocation2 + $0x250] sm:$0xff]
      %vm697 = vcmask 588800
      %v699 = vsel %vm697, %v615, 0
      %v702 = vsel %vm697, %v617, 0
      %v705 = vsel %vm697, %v619, 0
      %v708 = vsel %vm697, %v621, 0
      %710 = vmatpush.msra.mxu0 %v667
      %711 = vmatpush.msra.mxu0 %v664
      %712 = vmatpush.msra.mxu0 %v661
      %713 = vmatpush.msra.mxu0 %v658
      %714 = vmatpush.msra.mxu0 %v655
      %715 = vmatpush.msra.mxu0 %v652
      %716 = vmatpush.msra.mxu0 %v649
      %717 = vmatpush.msra.mxu0 %v646
      %718 = vmatpush.msra.mxu0 %v643
      %719 = vmatpush.msra.mxu0 %v640
      %720 = vmatpush.msra.mxu0 %v637
      %721 = vmatpush.msra.mxu0 %v634
      %722 = vmatpush.msra.mxu0 %v631
      %723 = vmatpush.msra.mxu0 %v628
      %724 = vmatpush.msra.mxu0 %v625
      %725 = vmatpush.msra.mxu0 %v622
      %726 = vmatmul.f32.gmra.mxu0 %v614
      %v727 = vpop.f32.mrf.mxu0
      %v728 = vadd.f32 0.0, %v727
      %729 = vmatmul.f32.gmra.mxu0 %v616
      %v730 = vpop.f32.mrf.mxu0
      %v731 = vadd.f32 0.0, %v730
      %732 = vmatmul.f32.gmra.mxu0 %v618
      %v733 = vpop.f32.mrf.mxu0
      %v734 = vadd.f32 0.0, %v733
      %735 = vmatmul.f32.gmra.mxu0 %v620
      %v736 = vpop.f32.mrf.mxu0
      %v737 = vadd.f32 0.0, %v736
      %738 = vdwg.mxu0
      %739 = vmatpush.msra.mxu0 0.0
      %740 = vmatpush.msra.mxu0 0.0
      %741 = vmatpush.msra.mxu0 0.0
      %742 = vmatpush.msra.mxu0 0.0
      %743 = vmatpush.msra.mxu0 0.0
      %744 = vmatpush.msra.mxu0 0.0
      %745 = vmatpush.msra.mxu0 0.0
      %746 = vmatpush.msra.mxu0 %v694
      %747 = vmatpush.msra.mxu0 %v691
      %748 = vmatpush.msra.mxu0 %v688
      %749 = vmatpush.msra.mxu0 %v685
      %750 = vmatpush.msra.mxu0 %v682
      %751 = vmatpush.msra.mxu0 %v679
      %752 = vmatpush.msra.mxu0 %v676
      %753 = vmatpush.msra.mxu0 %v673
      %754 = vmatpush.msra.mxu0 %v670
      %755 = vmatmul.f32.gmra.mxu0 %v699
      %v756 = vpop.f32.mrf.mxu0
      %v757 = vadd.f32 %v728, %v756
      %758 = vmatmul.f32.gmra.mxu0 %v702
      %v759 = vpop.f32.mrf.mxu0
      %v760 = vadd.f32 %v731, %v759
      %761 = vmatmul.f32.gmra.mxu0 %v705
      %v762 = vpop.f32.mrf.mxu0
      %v763 = vadd.f32 %v734, %v762
      %764 = vmatmul.f32.gmra.mxu0 %v708
      %v765 = vpop.f32.mrf.mxu0
      %v766 = vadd.f32 %v737, %v765
      %767 = vdwg.mxu0
      %768 = vmatpush.msra.mxu0 %v668
      %769 = vmatpush.msra.mxu0 %v665
      %770 = vmatpush.msra.mxu0 %v662
      %771 = vmatpush.msra.mxu0 %v659
      %772 = vmatpush.msra.mxu0 %v656
      %773 = vmatpush.msra.mxu0 %v653
      %774 = vmatpush.msra.mxu0 %v650
      %775 = vmatpush.msra.mxu0 %v647
      %776 = vmatpush.msra.mxu0 %v644
      %777 = vmatpush.msra.mxu0 %v641
      %778 = vmatpush.msra.mxu0 %v638
      %779 = vmatpush.msra.mxu0 %v635
      %780 = vmatpush.msra.mxu0 %v632
      %781 = vmatpush.msra.mxu0 %v629
      %782 = vmatpush.msra.mxu0 %v626
      %783 = vmatpush.msra.mxu0 %v623
      %784 = vmatmul.f32.gmra.mxu0 %v614
      %v785 = vpop.f32.mrf.mxu0
      %v786 = vadd.f32 0.0, %v785
      %787 = vmatmul.f32.gmra.mxu0 %v616
      %v788 = vpop.f32.mrf.mxu0
      %v789 = vadd.f32 0.0, %v788
      %790 = vmatmul.f32.gmra.mxu0 %v618
      %v791 = vpop.f32.mrf.mxu0
      %v792 = vadd.f32 0.0, %v791
      %793 = vmatmul.f32.gmra.mxu0 %v620
      %v794 = vpop.f32.mrf.mxu0
      %v795 = vadd.f32 0.0, %v794
      %796 = vdwg.mxu0
      %797 = vmatpush.msra.mxu0 0.0
      %798 = vmatpush.msra.mxu0 0.0
      %799 = vmatpush.msra.mxu0 0.0
      %800 = vmatpush.msra.mxu0 0.0
      %801 = vmatpush.msra.mxu0 0.0
      %802 = vmatpush.msra.mxu0 0.0
      %803 = vmatpush.msra.mxu0 0.0
      %804 = vmatpush.msra.mxu0 %v695
      %805 = vmatpush.msra.mxu0 %v692
      %806 = vmatpush.msra.mxu0 %v689
      %807 = vmatpush.msra.mxu0 %v686
      %808 = vmatpush.msra.mxu0 %v683
      %809 = vmatpush.msra.mxu0 %v680
      %810 = vmatpush.msra.mxu0 %v677
      %811 = vmatpush.msra.mxu0 %v674
      %812 = vmatpush.msra.mxu0 %v671
      %813 = vmatmul.f32.gmra.mxu0 %v699
      %v814 = vpop.f32.mrf.mxu0
      %v815 = vadd.f32 %v786, %v814
      %816 = vmatmul.f32.gmra.mxu0 %v702
      %v817 = vpop.f32.mrf.mxu0
      %v818 = vadd.f32 %v789, %v817
      %819 = vmatmul.f32.gmra.mxu0 %v705
      %v820 = vpop.f32.mrf.mxu0
      %v821 = vadd.f32 %v792, %v820
      %822 = vmatmul.f32.gmra.mxu0 %v708
      %v823 = vpop.f32.mrf.mxu0
      %v824 = vadd.f32 %v795, %v823
      %825 = vdwg.mxu0
      %826 = vmatpush.msra.mxu0 %v669
      %827 = vmatpush.msra.mxu0 %v666
      %828 = vmatpush.msra.mxu0 %v663
      %829 = vmatpush.msra.mxu0 %v660
      %830 = vmatpush.msra.mxu0 %v657
      %831 = vmatpush.msra.mxu0 %v654
      %832 = vmatpush.msra.mxu0 %v651
      %833 = vmatpush.msra.mxu0 %v648
      %834 = vmatpush.msra.mxu0 %v645
      %835 = vmatpush.msra.mxu0 %v642
      %836 = vmatpush.msra.mxu0 %v639
      %837 = vmatpush.msra.mxu0 %v636
      %838 = vmatpush.msra.mxu0 %v633
      %839 = vmatpush.msra.mxu0 %v630
      %840 = vmatpush.msra.mxu0 %v627
      %841 = vmatpush.msra.mxu0 %v624
      %842 = vmatmul.f32.gmra.mxu0 %v614
      %v843 = vpop.f32.mrf.mxu0
      %v844 = vadd.f32 0.0, %v843
      %845 = vmatmul.f32.gmra.mxu0 %v616
      %v846 = vpop.f32.mrf.mxu0
      %v847 = vadd.f32 0.0, %v846
      %848 = vmatmul.f32.gmra.mxu0 %v618
      %v849 = vpop.f32.mrf.mxu0
      %v850 = vadd.f32 0.0, %v849
      %851 = vmatmul.f32.gmra.mxu0 %v620
      %v852 = vpop.f32.mrf.mxu0
      %v853 = vadd.f32 0.0, %v852
      %854 = vdwg.mxu0
      %855 = vmatpush.msra.mxu0 0.0
      %856 = vmatpush.msra.mxu0 0.0
      %857 = vmatpush.msra.mxu0 0.0
      %858 = vmatpush.msra.mxu0 0.0
      %859 = vmatpush.msra.mxu0 0.0
      %860 = vmatpush.msra.mxu0 0.0
      %861 = vmatpush.msra.mxu0 0.0
      %862 = vmatpush.msra.mxu0 %v696
      %863 = vmatpush.msra.mxu0 %v693
      %864 = vmatpush.msra.mxu0 %v690
      %865 = vmatpush.msra.mxu0 %v687
      %866 = vmatpush.msra.mxu0 %v684
      %867 = vmatpush.msra.mxu0 %v681
      %868 = vmatpush.msra.mxu0 %v678
      %869 = vmatpush.msra.mxu0 %v675
      %870 = vmatpush.msra.mxu0 %v672
      %871 = vmatmul.f32.gmra.mxu0 %v699
      %v872 = vpop.f32.mrf.mxu0
      %v873 = vadd.f32 %v844, %v872
      %874 = vmatmul.f32.gmra.mxu0 %v702
      %v875 = vpop.f32.mrf.mxu0
      %v876 = vadd.f32 %v847, %v875
      %877 = vmatmul.f32.gmra.mxu0 %v705
      %v878 = vpop.f32.mrf.mxu0
      %v879 = vadd.f32 %v850, %v878
      %880 = vmatmul.f32.gmra.mxu0 %v708
      %v881 = vpop.f32.mrf.mxu0
      %v882 = vadd.f32 %v853, %v881
      %883 = vdwg.mxu0
      %v884 = vmax.f32 %v757, 0.0
      %v885 = vmax.f32 %v815, 0.0
      %v886 = vmax.f32 %v873, 0.0
      %v887 = vmax.f32 %v760, 0.0
      %v888 = vmax.f32 %v818, 0.0
      %v889 = vmax.f32 %v876, 0.0
      %v890 = vmax.f32 %v763, 0.0
      %v891 = vmax.f32 %v821, 0.0
      %v892 = vmax.f32 %v879, 0.0
      %v893 = vmax.f32 %v766, 0.0
      %v894 = vmax.f32 %v824, 0.0
      %v895 = vmax.f32 %v882, 0.0
      %v896 = vmin.f32 %v884, 6.4
      %v897 = vmin.f32 %v885, 6.4
      %v898 = vmin.f32 %v886, 6.4
      %v899 = vmin.f32 %v887, 6.4
      %v900 = vmin.f32 %v888, 6.4
      %v901 = vmin.f32 %v889, 6.4
      %v902 = vmin.f32 %v890, 6.4
      %v903 = vmin.f32 %v891, 6.4
      %v904 = vmin.f32 %v892, 6.4
      %v905 = vmin.f32 %v893, 6.4
      %v906 = vmin.f32 %v894, 6.4
      %v907 = vmin.f32 %v895, 6.4
      %v908 = vld [vmem:[%s2] sm:$0x7]
      %v910 = vperm.slane %v908, 0
      %v911 = vperm.slane %v908, 1
      %v912 = vperm.slane %v908, 2
      %v916 = vmul.f32 %v896, %v910
      %v917 = vmul.f32 %v897, %v911
      %v918 = vmul.f32 %v898, %v912
      %v919 = vmul.f32 %v899, %v910
      %v920 = vmul.f32 %v900, %v911
      %v921 = vmul.f32 %v901, %v912
      %v922 = vmul.f32 %v902, %v910
      %v923 = vmul.f32 %v903, %v911
      %v924 = vmul.f32 %v904, %v912
      %v925 = vmul.f32 %v905, %v910
      %v926 = vmul.f32 %v906, %v911
      %v927 = vmul.f32 %v907, %v912
      %928 = vrot.lane.b32.xlu0 %v916, 1
      %v929 = vpop.permute.xlu0 %928
      %930 = vrot.lane.b32.xlu0 %v919, 1
      %v931 = vpop.permute.xlu0 %930
      %932 = vrot.lane.b32.xlu0 %v922, 1
      %v933 = vpop.permute.xlu0 %932
      %934 = vrot.lane.b32.xlu0 %v925, 1
      %v935 = vpop.permute.xlu0 %934
      %936 = vrot.lane.b32.xlu0 %v917, 1
      %v937 = vpop.permute.xlu0 %936
      %938 = vrot.lane.b32.xlu0 %v920, 1
      %v939 = vpop.permute.xlu0 %938
      %940 = vrot.lane.b32.xlu0 %v923, 1
      %v941 = vpop.permute.xlu0 %940
      %942 = vrot.lane.b32.xlu0 %v926, 1
      %v943 = vpop.permute.xlu0 %942
      %944 = vrot.lane.b32.xlu0 %v918, 1
      %v945 = vpop.permute.xlu0 %944
      %946 = vrot.lane.b32.xlu0 %v921, 1
      %v947 = vpop.permute.xlu0 %946
      %948 = vrot.lane.b32.xlu0 %v924, 1
      %v949 = vpop.permute.xlu0 %948
      %950 = vrot.lane.b32.xlu0 %v927, 1
      %v951 = vpop.permute.xlu0 %950
      %v952 = vlaneseq
      %v953 = vand.u32 %v952, 127
      %vm954 = vcmp.lt.s32.totalorder %v953, 1
      %v955 = vsel %vm954, %v937, %v945
      %v956 = vsel %vm954, %v939, %v947
      %v957 = vsel %vm954, %v941, %v949
      %v958 = vsel %vm954, %v943, %v951
      %v959 = vsel %vm954, %v929, %v937
      %v960 = vsel %vm954, %v931, %v939
      %v961 = vsel %vm954, %v933, %v941
      %v962 = vsel %vm954, %v935, %v943
      %v963 = vsel %vm954, %v945, %v929
      %v964 = vsel %vm954, %v947, %v931
      %v965 = vsel %vm954, %v949, %v933
      %v966 = vsel %vm954, %v951, %v935
      %967 = vrot.lane.b32.xlu0 %v916, 127
      %v968 = vpop.permute.xlu0 %967
      %969 = vrot.lane.b32.xlu0 %v919, 127
      %v970 = vpop.permute.xlu0 %969
      %971 = vrot.lane.b32.xlu0 %v922, 127
      %v972 = vpop.permute.xlu0 %971
      %973 = vrot.lane.b32.xlu0 %v925, 127
      %v974 = vpop.permute.xlu0 %973
      %975 = vrot.lane.b32.xlu0 %v917, 127
      %v976 = vpop.permute.xlu0 %975
      %977 = vrot.lane.b32.xlu0 %v920, 127
      %v978 = vpop.permute.xlu0 %977
      %979 = vrot.lane.b32.xlu0 %v923, 127
      %v980 = vpop.permute.xlu0 %979
      %981 = vrot.lane.b32.xlu0 %v926, 127
      %v982 = vpop.permute.xlu0 %981
      %983 = vrot.lane.b32.xlu0 %v918, 127
      %v984 = vpop.permute.xlu0 %983
      %985 = vrot.lane.b32.xlu0 %v921, 127
      %v986 = vpop.permute.xlu0 %985
      %987 = vrot.lane.b32.xlu0 %v924, 127
      %v988 = vpop.permute.xlu0 %987
      %989 = vrot.lane.b32.xlu0 %v927, 127
      %v990 = vpop.permute.xlu0 %989
      %vm991 = vcmp.lt.s32.totalorder %v953, 127
      %v992 = vsel %vm991, %v976, %v984
      %v993 = vsel %vm991, %v978, %v986
      %v994 = vsel %vm991, %v980, %v988
      %v995 = vsel %vm991, %v982, %v990
      %v996 = vsel %vm991, %v968, %v976
      %v997 = vsel %vm991, %v970, %v978
      %v998 = vsel %vm991, %v972, %v980
      %v999 = vsel %vm991, %v974, %v982
      %v1000 = vsel %vm991, %v984, %v968
      %v1001 = vsel %vm991, %v986, %v970
      %v1002 = vsel %vm991, %v988, %v972
      %v1003 = vsel %vm991, %v990, %v974
      %v1004 = vmax.f32 %v963, %v996
      %v1005 = vmax.f32 %v959, %v992
      %v1006 = vmax.f32 %v955, %v1000
      %v1007 = vmax.f32 %v964, %v997
      %v1008 = vmax.f32 %v960, %v993
      %v1009 = vmax.f32 %v956, %v1001
      %v1010 = vmax.f32 %v965, %v998
      %v1011 = vmax.f32 %v961, %v994
      %v1012 = vmax.f32 %v957, %v1002
      %v1013 = vmax.f32 %v966, %v999
      %v1014 = vmax.f32 %v962, %v995
      %v1015 = vmax.f32 %v958, %v1003
      %v1016 = vmax.f32 %v916, %v1004
      %v1017 = vmax.f32 %v917, %v1005
      %v1018 = vmax.f32 %v918, %v1006
      %v1019 = vmax.f32 %v919, %v1007
      %v1020 = vmax.f32 %v920, %v1008
      %v1021 = vmax.f32 %v921, %v1009
      %v1022 = vmax.f32 %v922, %v1010
      %v1023 = vmax.f32 %v923, %v1011
      %v1024 = vmax.f32 %v924, %v1012
      %v1025 = vmax.f32 %v925, %v1013
      %v1026 = vmax.f32 %v926, %v1014
      %v1027 = vmax.f32 %v927, %v1015
      %1028 = vrot.lane.b32.xlu0 %v1016, 21
      %v1029 = vpop.permute.xlu0 %1028
      %1030 = vrot.lane.b32.xlu0 %v1019, 21
      %v1031 = vpop.permute.xlu0 %1030
      %1032 = vrot.lane.b32.xlu0 %v1022, 21
      %v1033 = vpop.permute.xlu0 %1032
      %1034 = vrot.lane.b32.xlu0 %v1025, 21
      %v1035 = vpop.permute.xlu0 %1034
      %1036 = vrot.lane.b32.xlu0 %v1017, 21
      %v1037 = vpop.permute.xlu0 %1036
      %1038 = vrot.lane.b32.xlu0 %v1020, 21
      %v1039 = vpop.permute.xlu0 %1038
      %1040 = vrot.lane.b32.xlu0 %v1023, 21
      %v1041 = vpop.permute.xlu0 %1040
      %1042 = vrot.lane.b32.xlu0 %v1026, 21
      %v1043 = vpop.permute.xlu0 %1042
      %1044 = vrot.lane.b32.xlu0 %v1018, 21
      %v1045 = vpop.permute.xlu0 %1044
      %1046 = vrot.lane.b32.xlu0 %v1021, 21
      %v1047 = vpop.permute.xlu0 %1046
      %1048 = vrot.lane.b32.xlu0 %v1024, 21
      %v1049 = vpop.permute.xlu0 %1048
      %1050 = vrot.lane.b32.xlu0 %v1027, 21
      %v1051 = vpop.permute.xlu0 %1050
      %vm1052 = vcmp.lt.s32.totalorder %v953, 21
      %v1053 = vsel %vm1052, %v1037, %v1045
      %v1054 = vsel %vm1052, %v1039, %v1047
      %v1055 = vsel %vm1052, %v1041, %v1049
      %v1056 = vsel %vm1052, %v1043, %v1051
      %v1057 = vsel %vm1052, %v1029, %v1037
      %v1058 = vsel %vm1052, %v1031, %v1039
      %v1059 = vsel %vm1052, %v1033, %v1041
      %v1060 = vsel %vm1052, %v1035, %v1043
      %v1061 = vsel %vm1052, %v1045, %v1029
      %v1062 = vsel %vm1052, %v1047, %v1031
      %v1063 = vsel %vm1052, %v1049, %v1033
      %v1064 = vsel %vm1052, %v1051, %v1035
      %1065 = vrot.lane.b32.xlu0 %v1016, 107
      %v1066 = vpop.permute.xlu0 %1065
      %1067 = vrot.lane.b32.xlu0 %v1019, 107
      %v1068 = vpop.permute.xlu0 %1067
      %1069 = vrot.lane.b32.xlu0 %v1022, 107
      %v1070 = vpop.permute.xlu0 %1069
      %1071 = vrot.lane.b32.xlu0 %v1025, 107
      %v1072 = vpop.permute.xlu0 %1071
      %1073 = vrot.lane.b32.xlu0 %v1017, 107
      %v1074 = vpop.permute.xlu0 %1073
      %1075 = vrot.lane.b32.xlu0 %v1020, 107
      %v1076 = vpop.permute.xlu0 %1075
      %1077 = vrot.lane.b32.xlu0 %v1023, 107
      %v1078 = vpop.permute.xlu0 %1077
      %1079 = vrot.lane.b32.xlu0 %v1026, 107
      %v1080 = vpop.permute.xlu0 %1079
      %1081 = vrot.lane.b32.xlu0 %v1018, 107
      %v1082 = vpop.permute.xlu0 %1081
      %1083 = vrot.lane.b32.xlu0 %v1021, 107
      %v1084 = vpop.permute.xlu0 %1083
      %1085 = vrot.lane.b32.xlu0 %v1024, 107
      %v1086 = vpop.permute.xlu0 %1085
      %1087 = vrot.lane.b32.xlu0 %v1027, 107
      %v1088 = vpop.permute.xlu0 %1087
      %vm1089 = vcmp.lt.s32.totalorder %v953, 107
      %v1090 = vsel %vm1089, %v1074, %v1082
      %v1091 = vsel %vm1089, %v1076, %v1084
      %v1092 = vsel %vm1089, %v1078, %v1086
      %v1093 = vsel %vm1089, %v1080, %v1088
      %v1094 = vsel %vm1089, %v1066, %v1074
      %v1095 = vsel %vm1089, %v1068, %v1076
      %v1096 = vsel %vm1089, %v1070, %v1078
      %v1097 = vsel %vm1089, %v1072, %v1080
      %v1098 = vsel %vm1089, %v1082, %v1066
      %v1099 = vsel %vm1089, %v1084, %v1068
      %v1100 = vsel %vm1089, %v1086, %v1070
      %v1101 = vsel %vm1089, %v1088, %v1072
      %v1102 = vmax.f32 %v1061, %v1094
      %v1103 = vmax.f32 %v1057, %v1090
      %v1104 = vmax.f32 %v1053, %v1098
      %v1105 = vmax.f32 %v1062, %v1095
      %v1106 = vmax.f32 %v1058, %v1091
      %v1107 = vmax.f32 %v1054, %v1099
      %v1108 = vmax.f32 %v1063, %v1096
      %v1109 = vmax.f32 %v1059, %v1092
      %v1110 = vmax.f32 %v1055, %v1100
      %v1111 = vmax.f32 %v1064, %v1097
      %v1112 = vmax.f32 %v1060, %v1093
      %v1113 = vmax.f32 %v1056, %v1101
      %v1114 = vmax.f32 %v1016, %v1102
      %v1115 = vmax.f32 %v1017, %v1103
      %v1116 = vmax.f32 %v1018, %v1104
      %v1117 = vmax.f32 %v1019, %v1105
      %v1118 = vmax.f32 %v1020, %v1106
      %v1119 = vmax.f32 %v1021, %v1107
      %v1120 = vmax.f32 %v1022, %v1108
      %v1121 = vmax.f32 %v1023, %v1109
      %v1122 = vmax.f32 %v1024, %v1110
      %v1123 = vmax.f32 %v1025, %v1111
      %v1124 = vmax.f32 %v1026, %v1112
      %v1125 = vmax.f32 %v1027, %v1113
      %1126 = vst [vmem:[%s170] sm:$0xff] %v1114
      %1127 = vst [vmem:[%s170 + $0x8] sm:$0xff] %v1115
      %1128 = vst [vmem:[%s170 + $0x10] sm:$0xff] %v1116
      %1129 = vst [vmem:[%s170 + $0x18] sm:$0xff] %v1117
      %1130 = vst [vmem:[%s170 + $0x20] sm:$0xff] %v1118
      %1131 = vst [vmem:[%s170 + $0x28] sm:$0xff] %v1119
      %1132 = vst [vmem:[%s170 + $0x30] sm:$0xff] %v1120
      %1133 = vst [vmem:[%s170 + $0x38] sm:$0xff] %v1121
      %1134 = vst [vmem:[%s170 + $0x40] sm:$0xff] %v1122
      %1135 = vst [vmem:[%s170 + $0x48] sm:$0xff] %v1123
      %1136 = vst [vmem:[%s170 + $0x50] sm:$0xff] %v1124
      %1137 = vst [vmem:[%s170 + $0x58] sm:$0xff] %v1125
      %p1138 = scmp.lt.s32.totalorder %s14, 1
      %s1139 = scalar_select %p1138, %s14, 1
      %s1140 = smul.addr %s1139, 12
      %s1141 = smul.addr %s1140, 8
      %s1142 = scalar_lea.vmem %s3, %s1141
      // Predicated region
      $region33: #{model_forward.1} parent=31 // pred_check
        %p1143 = pneg %p100
      $region34: #{model_forward.1} parent=31 // pred_check_branch
        %1145 = sbr.rel (%p1143) target = $region36
      $region35: #{model_forward.1} parent=31 // pred_region
        _
      $region36: #{model_forward.1} parent=31 // pred_fallthru
        _
    $region32: #{model_forward.1} parent=5 // pred_fallthru
      _
    %p1146 = scmp.le.s32.totalorder 2, %s9
    // Predicated region
    $region37: #{model_forward.1} parent=5 // pred_check
      %p1147 = pneg %p1146
    $region38: #{model_forward.1} parent=5 // pred_check_branch
      %1149 = sbr.rel (%p1147) target = $region40
    $region39: #{model_forward.1} parent=5 // pred_region
      %s1150 = ssub.s32 %s9, 2
      // Predicated region
      $region41: #{model_forward.1} parent=39 // pred_check
        %p1151 = pneg %p106
      $region42: #{model_forward.1} parent=39 // pred_check_branch
        %1153 = sbr.rel (%p1151) target = $region44
      $region43: #{model_forward.1} parent=39 // pred_region
        %p1154 = scmp.lt.s32.totalorder %s15, 1
        %s1155 = scalar_select %p1154, %s15, 1
        %s1156 = smul.addr %s1155, 12
        %s1157 = smul.addr %s1156, 8
        %s1158 = scalar_lea.vmem %s3, %s1157
      $region44: #{model_forward.1} parent=39 // pred_fallthru
        _
    $region40: #{model_forward.1} parent=5 // pred_fallthru
      _
  $region6: #{model_forward.1} parent=0 // loop_footer
    %s13 = sadd.s32 1, %s9
  $region7: #{model_forward.1} parent=0 // loop_footer_branch
    %8 = sbr.rel target = $region3
  $region8: #{model_forward.1} parent=0 // loop_exit
    _

</llo_original>
